<compile_context>
chip_gen: v7x
topology: tpu7x:2x2x1
jax: 0.10.0
libtpu: 0.0.40
codegen_flags: <defaults>
</compile_context>

<pallas_src>
import jax
import jax.numpy as jnp
import numpy as np
from jax import lax
from jax.experimental import pallas as pl
from jax.experimental.pallas import tpu as pltpu


def cbam_kernel(x_ref, w1_ref, b1_ref, w2_ref, b2_ref, wst_ref, bs_ref, o_ref):
    Bt, C, L = x_ref.shape
    K = wst_ref.shape[0]
    pad = (K - 1) // 2
    inv_L = jnp.float32(1.0 / L)
    x_dtype = x_ref.dtype

    # ---- tile-invariant values, hoisted out of the per-batch loop ----
    w1 = w1_ref[...]                       # (Cr, C) f32
    b1 = b1_ref[...]                       # (Cr, 1) f32
    w2 = w2_ref[...]                       # (C, Cr) f32
    b2 = b2_ref[...]                       # (C, 1)  f32
    bs = bs_ref[0]                         # scalar  f32 (SMEM)
    wst = wst_ref[...].astype(x_dtype)     # (K, C): MXU consumes x's native dtype
    pos = lax.broadcasted_iota(jnp.int32, (1, L), 1)
    valid = [None if k == pad else
             jnp.logical_and(pos + (k - pad) >= 0, pos + (k - pad) < L)
             for k in range(K)]            # zero-padding edge masks, (1, L)

    def process(b):
        xb = x_ref[b]                                                      # (C, L)

        # ---------- channel gate ----------
        # AdaptiveAvgPool1d(1) -> Conv1d(C,Cr,1) -> ReLU -> Conv1d(Cr,C,1) -> Sigmoid
        avg = jnp.sum(xb.astype(jnp.float32), axis=1, keepdims=True) * inv_L  # (C, 1)
        h = jnp.maximum(
            jnp.dot(w1, avg, preferred_element_type=jnp.float32) + b1, 0.0)   # (Cr, 1)
        gate_c = jax.nn.sigmoid(
            jnp.dot(w2, h, preferred_element_type=jnp.float32) + b2)          # (C, 1)

        # ---------- spatial gate ----------
        # Conv1d(C -> 1, kernel=K, padding=pad): one fused channel-reduction
        # matmul, then K-1 lane shifts (XLU) with zero-padding edge masks.
        t = jnp.dot(wst, xb, preferred_element_type=jnp.float32)              # (K, L)
        acc = t[pad:pad + 1, :]                                                # center tap
        for k in range(K):
            if k == pad:
                continue
            d = k - pad
            row = pltpu.roll(t[k:k + 1, :], shift=(-d) % L, axis=1)           # row[p]=t[k,p+d]
            acc = acc + jnp.where(valid[k], row, 0.0)
        gate_s = jax.nn.sigmoid(acc + bs)                                      # (1, L)

        # ---------- fused apply: o = x * (gate_c (+) gate_s) ----------
        gate = (gate_c + gate_s).astype(x_dtype)                               # (C, L)
        o_ref[b] = (xb * gate).astype(o_ref.dtype)

    if Bt <= 8:
        for b in range(Bt):          # short static unroll: full scheduler visibility
            process(b)
    else:
        @pl.loop(0, Bt)              # bounded program size for large batch blocks
        def _(b):
            process(b)


def _choose_block_batch(B, C, L, itemsize, max_tile_bytes=2 << 20):
    """Largest batch block Bt that divides B and keeps the (Bt, C, L) input
    tile within the budget; mildly prefers >= 2 grid steps (v7x dual-TC) when
    that does not shrink the tile below ~1 MiB."""
    per_batch = C * L * itemsize
    divisors = [d for d in range(1, B + 1) if B % d == 0]
    fits = [d for d in divisors if d * per_batch <= max_tile_bytes]
    if not fits:
        return 1
    best = max(fits)
    if best == B and B > 1:
        smaller = [d for d in fits if d < B]
        if smaller and max(smaller) * per_batch >= (1 << 20):
            best = max(smaller)
    return best


def cbam_pallas(x, params, *, max_tile_bytes=2 << 20):
    w1, b1, w2, b2, ws, bs = params
    B, C, L = x.shape
    Cr = w1.shape[0]
    K = ws.shape[1]

    Bt = _choose_block_batch(B, C, L, jnp.dtype(x.dtype).itemsize, max_tile_bytes)
    nblocks = B // Bt

    # Small parameters: gate math stays in f32 regardless of the input dtype.
    w1f = w1.astype(jnp.float32)                       # (Cr, C)
    b1c = b1.astype(jnp.float32).reshape(Cr, 1)        # (Cr, 1)
    w2f = w2.astype(jnp.float32)                       # (C, Cr)
    b2c = b2.astype(jnp.float32).reshape(C, 1)         # (C, 1)
    wst = ws.astype(jnp.float32).T                     # (K, C) tap-major spatial weights
    bs1 = bs.astype(jnp.float32).reshape(1)            # scalar spatial bias -> SMEM

    return pl.pallas_call(
        cbam_kernel,
        out_shape=jax.ShapeDtypeStruct((B, C, L), x.dtype),
        grid_spec=pltpu.PrefetchScalarGridSpec(
            num_scalar_prefetch=0,
            grid=(nblocks,),
            in_specs=[
                pl.BlockSpec((Bt, C, L), lambda i: (i, 0, 0)),        # x (native layout)
                pl.BlockSpec((Cr, C), lambda i: (0, 0)),              # w1
                pl.BlockSpec((Cr, 1), lambda i: (0, 0)),              # b1
                pl.BlockSpec((C, Cr), lambda i: (0, 0)),              # w2
                pl.BlockSpec((C, 1), lambda i: (0, 0)),               # b2
                pl.BlockSpec((K, C), lambda i: (0, 0)),               # spatial weight
                pl.BlockSpec(memory_space=pltpu.MemorySpace.SMEM),    # spatial bias scalar
            ],
            out_specs=pl.BlockSpec((Bt, C, L), lambda i: (i, 0, 0)),
        ),
        compiler_params=pltpu.CompilerParams(
            dimension_semantics=("parallel",),       # batch blocks independent (megacore)
            vmem_limit_bytes=32 * 1024 * 1024,       # v7x-safe (64 MiB/TC total)
        ),
    )(x, w1f, b1c, w2f, b2c, wst, bs1)


def cbam_ref(x, params):
    """Pure-JAX reference mirroring the PyTorch forward pass."""
    w1, b1, w2, b2, ws, bs = params
    B, C, L = x.shape
    K = ws.shape[1]
    pad = (K - 1) // 2
    # channel gate
    avg = jnp.mean(x, axis=2, keepdims=True)                                  # (B, C, 1)
    h = jnp.maximum(jnp.einsum('oc,bci->boi', w1, avg) + b1[None, :, None], 0.0)
    gate_c = jax.nn.sigmoid(jnp.einsum('oc,bci->boi', w2, h) + b2[None, :, None])
    channel_wise = gate_c * x
    # spatial gate (conv1d C->1, kernel=K, padding=pad)
    xp = jnp.pad(x, ((0, 0), (0, 0), (pad, pad)))
    s = jnp.zeros((B, L), jnp.float32)
    for k in range(K):
        s = s + jnp.einsum('c,bcl->bl', ws[:, k], xp[:, :, k:k + L])
    gate_s = jax.nn.sigmoid(s[:, None, :] + bs[0])
    spatial_wise = gate_s * x
    return channel_wise + spatial_wise


if __name__ == "__main__":
    B, C, L = 2, 32, 64
    reduction_ratio = 16
    Cr = C // reduction_ratio

    key = jax.random.PRNGKey(0)
    kx, k1, k2, k3, k4, k5, k6 = jax.random.split(key, 7)
    x = jax.random.normal(kx, (B, C, L), jnp.float32)
    # Conv1d weights: (out, in, k) with k squeezed out where k == 1.
    w1 = 0.1 * jax.random.normal(k1, (Cr, C), jnp.float32)     # Conv1d(C, Cr, 1)
    b1 = 0.1 * jax.random.normal(k2, (Cr,), jnp.float32)
    w2 = 0.1 * jax.random.normal(k3, (C, Cr), jnp.float32)     # Conv1d(Cr, C, 1)
    b2 = 0.1 * jax.random.normal(k4, (C,), jnp.float32)
    ws = 0.1 * jax.random.normal(k5, (C, 7), jnp.float32)      # Conv1d(C, 1, 7, pad=3)
    bs = 0.1 * jax.random.normal(k6, (1,), jnp.float32)
    params = (w1, b1, w2, b2, ws, bs)

    out = cbam_pallas(x, params)
    out = jax.block_until_ready(out)

    ref = cbam_ref(x, params)
    np.testing.assert_allclose(np.asarray(out), np.asarray(ref), rtol=1e-4, atol=1e-5)
    print("KERNEL_OK")
</pallas_src>

<mosaic_0001>
module attributes {stable_mosaic.version = 11 : i64} {
  func.func @cbam_kernel(%arg0: i32, %arg1: memref<2x32x64xf32, #tpu.memory_space<vmem>>, %arg2: memref<2x32xf32, #tpu.memory_space<vmem>>, %arg3: memref<2x1xf32, #tpu.memory_space<vmem>>, %arg4: memref<32x2xf32, #tpu.memory_space<vmem>>, %arg5: memref<32x1xf32, #tpu.memory_space<vmem>>, %arg6: memref<7x32xf32, #tpu.memory_space<vmem>>, %arg7: memref<1xf32, #tpu.memory_space<smem>>, %arg8: memref<2x32x64xf32, #tpu.memory_space<vmem>>) attributes {dimension_semantics = [#tpu.dimension_semantics<parallel>], iteration_bounds = array<i64: 1>, scalar_prefetch = 0 : i64, scratch_operands = 0 : i64, tpu.core_type = #tpu.core_type<tc>, window_params = [{transform_indices = @transform_0, window_bounds = array<i64: 2, 32, 64>}, {pipeline_mode = #tpu.pipeline_mode<synchronous>, transform_indices = @transform_1, window_bounds = array<i64: 2, 32>}, {pipeline_mode = #tpu.pipeline_mode<synchronous>, transform_indices = @transform_2, window_bounds = array<i64: 2, 1>}, {pipeline_mode = #tpu.pipeline_mode<synchronous>, transform_indices = @transform_3, window_bounds = array<i64: 32, 2>}, {pipeline_mode = #tpu.pipeline_mode<synchronous>, transform_indices = @transform_4, window_bounds = array<i64: 32, 1>}, {pipeline_mode = #tpu.pipeline_mode<synchronous>, transform_indices = @transform_5, window_bounds = array<i64: 7, 32>}, {transform_indices = @transform_6, window_bounds = array<i64: 1>}, {transform_indices = @transform_7, window_bounds = array<i64: 2, 32, 64>}]} {
    %c0 = arith.constant 0 : index
    %c0_0 = arith.constant 0 : index
    %0 = vector.load %arg2[%c0, %c0_0] : memref<2x32xf32, #tpu.memory_space<vmem>>, vector<2x32xf32>
    %c0_1 = arith.constant 0 : index
    %c0_2 = arith.constant 0 : index
    %1 = vector.load %arg3[%c0_1, %c0_2] : memref<2x1xf32, #tpu.memory_space<vmem>>, vector<2x1xf32>
    %c0_3 = arith.constant 0 : index
    %c0_4 = arith.constant 0 : index
    %2 = vector.load %arg4[%c0_3, %c0_4] : memref<32x2xf32, #tpu.memory_space<vmem>>, vector<32x2xf32>
    %c0_5 = arith.constant 0 : index
    %c0_6 = arith.constant 0 : index
    %3 = vector.load %arg5[%c0_5, %c0_6] : memref<32x1xf32, #tpu.memory_space<vmem>>, vector<32x1xf32>
    %c0_7 = arith.constant 0 : index
    %4 = memref.load %arg7[%c0_7] : memref<1xf32, #tpu.memory_space<smem>>
    %c0_8 = arith.constant 0 : index
    %c0_9 = arith.constant 0 : index
    %5 = vector.load %arg6[%c0_8, %c0_9] : memref<7x32xf32, #tpu.memory_space<vmem>>, vector<7x32xf32>
    %6 = tpu.iota {dimensions = array<i32: 1>} : vector<1x64xi32>
    %c-3_i32 = arith.constant -3 : i32
    %7 = vector.broadcast %c-3_i32 : i32 to vector<1x64xi32>
    %8 = arith.addi %6, %7 : vector<1x64xi32>
    %c0_i32 = arith.constant 0 : i32
    %9 = vector.broadcast %c0_i32 : i32 to vector<1x64xi32>
    %10 = arith.cmpi sge, %8, %9 : vector<1x64xi32>
    %c-3_i32_10 = arith.constant -3 : i32
    %11 = vector.broadcast %c-3_i32_10 : i32 to vector<1x64xi32>
    %12 = arith.addi %6, %11 : vector<1x64xi32>
    %c64_i32 = arith.constant 64 : i32
    %13 = vector.broadcast %c64_i32 : i32 to vector<1x64xi32>
    %14 = arith.cmpi slt, %12, %13 : vector<1x64xi32>
    %15 = arith.andi %10, %14 : vector<1x64xi1>
    %c-2_i32 = arith.constant -2 : i32
    %16 = vector.broadcast %c-2_i32 : i32 to vector<1x64xi32>
    %17 = arith.addi %6, %16 : vector<1x64xi32>
    %c0_i32_11 = arith.constant 0 : i32
    %18 = vector.broadcast %c0_i32_11 : i32 to vector<1x64xi32>
    %19 = arith.cmpi sge, %17, %18 : vector<1x64xi32>
    %c-2_i32_12 = arith.constant -2 : i32
    %20 = vector.broadcast %c-2_i32_12 : i32 to vector<1x64xi32>
    %21 = arith.addi %6, %20 : vector<1x64xi32>
    %c64_i32_13 = arith.constant 64 : i32
    %22 = vector.broadcast %c64_i32_13 : i32 to vector<1x64xi32>
    %23 = arith.cmpi slt, %21, %22 : vector<1x64xi32>
    %24 = arith.andi %19, %23 : vector<1x64xi1>
    %c-1_i32 = arith.constant -1 : i32
    %25 = vector.broadcast %c-1_i32 : i32 to vector<1x64xi32>
    %26 = arith.addi %6, %25 : vector<1x64xi32>
    %c0_i32_14 = arith.constant 0 : i32
    %27 = vector.broadcast %c0_i32_14 : i32 to vector<1x64xi32>
    %28 = arith.cmpi sge, %26, %27 : vector<1x64xi32>
    %c-1_i32_15 = arith.constant -1 : i32
    %29 = vector.broadcast %c-1_i32_15 : i32 to vector<1x64xi32>
    %30 = arith.addi %6, %29 : vector<1x64xi32>
    %c64_i32_16 = arith.constant 64 : i32
    %31 = vector.broadcast %c64_i32_16 : i32 to vector<1x64xi32>
    %32 = arith.cmpi slt, %30, %31 : vector<1x64xi32>
    %33 = arith.andi %28, %32 : vector<1x64xi1>
    %c1_i32 = arith.constant 1 : i32
    %34 = vector.broadcast %c1_i32 : i32 to vector<1x64xi32>
    %35 = arith.addi %6, %34 : vector<1x64xi32>
    %c0_i32_17 = arith.constant 0 : i32
    %36 = vector.broadcast %c0_i32_17 : i32 to vector<1x64xi32>
    %37 = arith.cmpi sge, %35, %36 : vector<1x64xi32>
    %c1_i32_18 = arith.constant 1 : i32
    %38 = vector.broadcast %c1_i32_18 : i32 to vector<1x64xi32>
    %39 = arith.addi %6, %38 : vector<1x64xi32>
    %c64_i32_19 = arith.constant 64 : i32
    %40 = vector.broadcast %c64_i32_19 : i32 to vector<1x64xi32>
    %41 = arith.cmpi slt, %39, %40 : vector<1x64xi32>
    %42 = arith.andi %37, %41 : vector<1x64xi1>
    %c2_i32 = arith.constant 2 : i32
    %43 = vector.broadcast %c2_i32 : i32 to vector<1x64xi32>
    %44 = arith.addi %6, %43 : vector<1x64xi32>
    %c0_i32_20 = arith.constant 0 : i32
    %45 = vector.broadcast %c0_i32_20 : i32 to vector<1x64xi32>
    %46 = arith.cmpi sge, %44, %45 : vector<1x64xi32>
    %c2_i32_21 = arith.constant 2 : i32
    %47 = vector.broadcast %c2_i32_21 : i32 to vector<1x64xi32>
    %48 = arith.addi %6, %47 : vector<1x64xi32>
    %c64_i32_22 = arith.constant 64 : i32
    %49 = vector.broadcast %c64_i32_22 : i32 to vector<1x64xi32>
    %50 = arith.cmpi slt, %48, %49 : vector<1x64xi32>
    %51 = arith.andi %46, %50 : vector<1x64xi1>
    %c3_i32 = arith.constant 3 : i32
    %52 = vector.broadcast %c3_i32 : i32 to vector<1x64xi32>
    %53 = arith.addi %6, %52 : vector<1x64xi32>
    %c0_i32_23 = arith.constant 0 : i32
    %54 = vector.broadcast %c0_i32_23 : i32 to vector<1x64xi32>
    %55 = arith.cmpi sge, %53, %54 : vector<1x64xi32>
    %c3_i32_24 = arith.constant 3 : i32
    %56 = vector.broadcast %c3_i32_24 : i32 to vector<1x64xi32>
    %57 = arith.addi %6, %56 : vector<1x64xi32>
    %c64_i32_25 = arith.constant 64 : i32
    %58 = vector.broadcast %c64_i32_25 : i32 to vector<1x64xi32>
    %59 = arith.cmpi slt, %57, %58 : vector<1x64xi32>
    %60 = arith.andi %55, %59 : vector<1x64xi1>
    %c0_26 = arith.constant 0 : index
    %c0_27 = arith.constant 0 : index
    %c0_28 = arith.constant 0 : index
    %61 = vector.load %arg1[%c0_26, %c0_27, %c0_28] : memref<2x32x64xf32, #tpu.memory_space<vmem>>, vector<1x32x64xf32>
    %62 = vector.shape_cast %61 : vector<1x32x64xf32> to vector<32x64xf32>
    %cst = arith.constant dense<0.000000e+00> : vector<32xf32>
    %63 = vector.multi_reduction <add>, %62, %cst [1] : vector<32x64xf32> to vector<32xf32>
    %64 = vector.shape_cast %63 : vector<32xf32> to vector<32x1xf32>
    %cst_29 = arith.constant 1.562500e-02 : f32
    %65 = vector.broadcast %cst_29 : f32 to vector<32x1xf32>
    %66 = arith.mulf %64, %65 : vector<32x1xf32>
    %cst_30 = arith.constant dense<0.000000e+00> : vector<2x1xf32>
    %67 = tpu.matmul %0, %66, %cst_30 {dimension_numbers = #tpu.dot_dimension_numbers<[1], [0], [0], [1], [0, 0, 1, 1], [], []>} : vector<2x32xf32>, vector<32x1xf32>, vector<2x1xf32> -> vector<2x1xf32>
    %68 = arith.addf %67, %1 : vector<2x1xf32>
    %cst_31 = arith.constant 0.000000e+00 : f32
    %69 = vector.broadcast %cst_31 : f32 to vector<2x1xf32>
    %70 = arith.maximumf %68, %69 : vector<2x1xf32>
    %cst_32 = arith.constant dense<0.000000e+00> : vector<32x1xf32>
    %71 = tpu.matmul %2, %70, %cst_32 {dimension_numbers = #tpu.dot_dimension_numbers<[1], [0], [0], [1], [0, 0, 1, 1], [], []>} : vector<32x2xf32>, vector<2x1xf32>, vector<32x1xf32> -> vector<32x1xf32>
    %72 = arith.addf %71, %3 : vector<32x1xf32>
    %73 = arith.negf %72 : vector<32x1xf32>
    %74 = math.exp %73 : vector<32x1xf32>
    %cst_33 = arith.constant 1.000000e+00 : f32
    %75 = vector.broadcast %cst_33 : f32 to vector<32x1xf32>
    %76 = arith.addf %75, %74 : vector<32x1xf32>
    %77 = arith.divf %75, %76 : vector<32x1xf32>
    %cst_34 = arith.constant dense<0.000000e+00> : vector<7x64xf32>
    %78 = tpu.matmul %5, %62, %cst_34 {dimension_numbers = #tpu.dot_dimension_numbers<[1], [0], [0], [1], [0, 0, 1, 1], [], []>} : vector<7x32xf32>, vector<32x64xf32>, vector<7x64xf32> -> vector<7x64xf32>
    %79 = vector.extract_strided_slice %78 {offsets = [3, 0], sizes = [1, 64], strides = [1, 1]} : vector<7x64xf32> to vector<1x64xf32>
    %80 = vector.extract_strided_slice %78 {offsets = [0, 0], sizes = [1, 64], strides = [1, 1]} : vector<7x64xf32> to vector<1x64xf32>
    %c3_i32_35 = arith.constant 3 : i32
    %81 = tpu.dynamic_rotate %80 by %c3_i32_35 dim 1 : vector<1x64xf32>, i32 -> vector<1x64xf32>
    %cst_36 = arith.constant 0.000000e+00 : f32
    %82 = vector.broadcast %cst_36 : f32 to vector<1x64xf32>
    %83 = arith.select %15, %81, %82 : vector<1x64xi1>, vector<1x64xf32>
    %84 = arith.addf %79, %83 : vector<1x64xf32>
    %85 = vector.extract_strided_slice %78 {offsets = [1, 0], sizes = [1, 64], strides = [1, 1]} : vector<7x64xf32> to vector<1x64xf32>
    %c2_i32_37 = arith.constant 2 : i32
    %86 = tpu.dynamic_rotate %85 by %c2_i32_37 dim 1 : vector<1x64xf32>, i32 -> vector<1x64xf32>
    %cst_38 = arith.constant 0.000000e+00 : f32
    %87 = vector.broadcast %cst_38 : f32 to vector<1x64xf32>
    %88 = arith.select %24, %86, %87 : vector<1x64xi1>, vector<1x64xf32>
    %89 = arith.addf %84, %88 : vector<1x64xf32>
    %90 = vector.extract_strided_slice %78 {offsets = [2, 0], sizes = [1, 64], strides = [1, 1]} : vector<7x64xf32> to vector<1x64xf32>
    %c1_i32_39 = arith.constant 1 : i32
    %91 = tpu.dynamic_rotate %90 by %c1_i32_39 dim 1 : vector<1x64xf32>, i32 -> vector<1x64xf32>
    %cst_40 = arith.constant 0.000000e+00 : f32
    %92 = vector.broadcast %cst_40 : f32 to vector<1x64xf32>
    %93 = arith.select %33, %91, %92 : vector<1x64xi1>, vector<1x64xf32>
    %94 = arith.addf %89, %93 : vector<1x64xf32>
    %95 = vector.extract_strided_slice %78 {offsets = [4, 0], sizes = [1, 64], strides = [1, 1]} : vector<7x64xf32> to vector<1x64xf32>
    %c63_i32 = arith.constant 63 : i32
    %96 = tpu.dynamic_rotate %95 by %c63_i32 dim 1 : vector<1x64xf32>, i32 -> vector<1x64xf32>
    %cst_41 = arith.constant 0.000000e+00 : f32
    %97 = vector.broadcast %cst_41 : f32 to vector<1x64xf32>
    %98 = arith.select %42, %96, %97 : vector<1x64xi1>, vector<1x64xf32>
    %99 = arith.addf %94, %98 : vector<1x64xf32>
    %100 = vector.extract_strided_slice %78 {offsets = [5, 0], sizes = [1, 64], strides = [1, 1]} : vector<7x64xf32> to vector<1x64xf32>
    %c62_i32 = arith.constant 62 : i32
    %101 = tpu.dynamic_rotate %100 by %c62_i32 dim 1 : vector<1x64xf32>, i32 -> vector<1x64xf32>
    %cst_42 = arith.constant 0.000000e+00 : f32
    %102 = vector.broadcast %cst_42 : f32 to vector<1x64xf32>
    %103 = arith.select %51, %101, %102 : vector<1x64xi1>, vector<1x64xf32>
    %104 = arith.addf %99, %103 : vector<1x64xf32>
    %105 = vector.extract_strided_slice %78 {offsets = [6, 0], sizes = [1, 64], strides = [1, 1]} : vector<7x64xf32> to vector<1x64xf32>
    %c61_i32 = arith.constant 61 : i32
    %106 = tpu.dynamic_rotate %105 by %c61_i32 dim 1 : vector<1x64xf32>, i32 -> vector<1x64xf32>
    %cst_43 = arith.constant 0.000000e+00 : f32
    %107 = vector.broadcast %cst_43 : f32 to vector<1x64xf32>
    %108 = arith.select %60, %106, %107 : vector<1x64xi1>, vector<1x64xf32>
    %109 = arith.addf %104, %108 : vector<1x64xf32>
    %110 = vector.broadcast %4 : f32 to vector<1x64xf32>
    %111 = arith.addf %109, %110 : vector<1x64xf32>
    %112 = arith.negf %111 : vector<1x64xf32>
    %113 = math.exp %112 : vector<1x64xf32>
    %cst_44 = arith.constant 1.000000e+00 : f32
    %114 = vector.broadcast %cst_44 : f32 to vector<1x64xf32>
    %115 = arith.addf %114, %113 : vector<1x64xf32>
    %116 = arith.divf %114, %115 : vector<1x64xf32>
    %117 = vector.broadcast %77 : vector<32x1xf32> to vector<32x64xf32>
    %118 = vector.broadcast %116 : vector<1x64xf32> to vector<32x64xf32>
    %119 = arith.addf %117, %118 : vector<32x64xf32>
    %120 = arith.mulf %62, %119 : vector<32x64xf32>
    %c0_45 = arith.constant 0 : index
    %c0_46 = arith.constant 0 : index
    %c0_47 = arith.constant 0 : index
    %121 = vector.load %arg8[%c0_45, %c0_46, %c0_47] : memref<2x32x64xf32, #tpu.memory_space<vmem>>, vector<1x32x64xf32>
    %122 = vector.shape_cast %121 : vector<1x32x64xf32> to vector<32x64xf32>
    %123 = vector.shape_cast %120 : vector<32x64xf32> to vector<1x32x64xf32>
    tpu.vector_store %arg8[%c0_45, %c0_46, %c0_47], %123 {strides = array<i32>} : memref<2x32x64xf32, #tpu.memory_space<vmem>>, vector<1x32x64xf32>,
    %c1 = arith.constant 1 : index
    %c0_48 = arith.constant 0 : index
    %c0_49 = arith.constant 0 : index
    %124 = vector.load %arg1[%c1, %c0_48, %c0_49] : memref<2x32x64xf32, #tpu.memory_space<vmem>>, vector<1x32x64xf32>
    %125 = vector.shape_cast %124 : vector<1x32x64xf32> to vector<32x64xf32>
    %cst_50 = arith.constant dense<0.000000e+00> : vector<32xf32>
    %126 = vector.multi_reduction <add>, %125, %cst_50 [1] : vector<32x64xf32> to vector<32xf32>
    %127 = vector.shape_cast %126 : vector<32xf32> to vector<32x1xf32>
    %cst_51 = arith.constant 1.562500e-02 : f32
    %128 = vector.broadcast %cst_51 : f32 to vector<32x1xf32>
    %129 = arith.mulf %127, %128 : vector<32x1xf32>
    %cst_52 = arith.constant dense<0.000000e+00> : vector<2x1xf32>
    %130 = tpu.matmul %0, %129, %cst_52 {dimension_numbers = #tpu.dot_dimension_numbers<[1], [0], [0], [1], [0, 0, 1, 1], [], []>} : vector<2x32xf32>, vector<32x1xf32>, vector<2x1xf32> -> vector<2x1xf32>
    %131 = arith.addf %130, %1 : vector<2x1xf32>
    %cst_53 = arith.constant 0.000000e+00 : f32
    %132 = vector.broadcast %cst_53 : f32 to vector<2x1xf32>
    %133 = arith.maximumf %131, %132 : vector<2x1xf32>
    %cst_54 = arith.constant dense<0.000000e+00> : vector<32x1xf32>
    %134 = tpu.matmul %2, %133, %cst_54 {dimension_numbers = #tpu.dot_dimension_numbers<[1], [0], [0], [1], [0, 0, 1, 1], [], []>} : vector<32x2xf32>, vector<2x1xf32>, vector<32x1xf32> -> vector<32x1xf32>
    %135 = arith.addf %134, %3 : vector<32x1xf32>
    %136 = arith.negf %135 : vector<32x1xf32>
    %137 = math.exp %136 : vector<32x1xf32>
    %cst_55 = arith.constant 1.000000e+00 : f32
    %138 = vector.broadcast %cst_55 : f32 to vector<32x1xf32>
    %139 = arith.addf %138, %137 : vector<32x1xf32>
    %140 = arith.divf %138, %139 : vector<32x1xf32>
    %cst_56 = arith.constant dense<0.000000e+00> : vector<7x64xf32>
    %141 = tpu.matmul %5, %125, %cst_56 {dimension_numbers = #tpu.dot_dimension_numbers<[1], [0], [0], [1], [0, 0, 1, 1], [], []>} : vector<7x32xf32>, vector<32x64xf32>, vector<7x64xf32> -> vector<7x64xf32>
    %142 = vector.extract_strided_slice %141 {offsets = [3, 0], sizes = [1, 64], strides = [1, 1]} : vector<7x64xf32> to vector<1x64xf32>
    %143 = vector.extract_strided_slice %141 {offsets = [0, 0], sizes = [1, 64], strides = [1, 1]} : vector<7x64xf32> to vector<1x64xf32>
    %c3_i32_57 = arith.constant 3 : i32
    %144 = tpu.dynamic_rotate %143 by %c3_i32_57 dim 1 : vector<1x64xf32>, i32 -> vector<1x64xf32>
    %cst_58 = arith.constant 0.000000e+00 : f32
    %145 = vector.broadcast %cst_58 : f32 to vector<1x64xf32>
    %146 = arith.select %15, %144, %145 : vector<1x64xi1>, vector<1x64xf32>
    %147 = arith.addf %142, %146 : vector<1x64xf32>
    %148 = vector.extract_strided_slice %141 {offsets = [1, 0], sizes = [1, 64], strides = [1, 1]} : vector<7x64xf32> to vector<1x64xf32>
    %c2_i32_59 = arith.constant 2 : i32
    %149 = tpu.dynamic_rotate %148 by %c2_i32_59 dim 1 : vector<1x64xf32>, i32 -> vector<1x64xf32>
    %cst_60 = arith.constant 0.000000e+00 : f32
    %150 = vector.broadcast %cst_60 : f32 to vector<1x64xf32>
    %151 = arith.select %24, %149, %150 : vector<1x64xi1>, vector<1x64xf32>
    %152 = arith.addf %147, %151 : vector<1x64xf32>
    %153 = vector.extract_strided_slice %141 {offsets = [2, 0], sizes = [1, 64], strides = [1, 1]} : vector<7x64xf32> to vector<1x64xf32>
    %c1_i32_61 = arith.constant 1 : i32
    %154 = tpu.dynamic_rotate %153 by %c1_i32_61 dim 1 : vector<1x64xf32>, i32 -> vector<1x64xf32>
    %cst_62 = arith.constant 0.000000e+00 : f32
    %155 = vector.broadcast %cst_62 : f32 to vector<1x64xf32>
    %156 = arith.select %33, %154, %155 : vector<1x64xi1>, vector<1x64xf32>
    %157 = arith.addf %152, %156 : vector<1x64xf32>
    %158 = vector.extract_strided_slice %141 {offsets = [4, 0], sizes = [1, 64], strides = [1, 1]} : vector<7x64xf32> to vector<1x64xf32>
    %c63_i32_63 = arith.constant 63 : i32
    %159 = tpu.dynamic_rotate %158 by %c63_i32_63 dim 1 : vector<1x64xf32>, i32 -> vector<1x64xf32>
    %cst_64 = arith.constant 0.000000e+00 : f32
    %160 = vector.broadcast %cst_64 : f32 to vector<1x64xf32>
    %161 = arith.select %42, %159, %160 : vector<1x64xi1>, vector<1x64xf32>
    %162 = arith.addf %157, %161 : vector<1x64xf32>
    %163 = vector.extract_strided_slice %141 {offsets = [5, 0], sizes = [1, 64], strides = [1, 1]} : vector<7x64xf32> to vector<1x64xf32>
    %c62_i32_65 = arith.constant 62 : i32
    %164 = tpu.dynamic_rotate %163 by %c62_i32_65 dim 1 : vector<1x64xf32>, i32 -> vector<1x64xf32>
    %cst_66 = arith.constant 0.000000e+00 : f32
    %165 = vector.broadcast %cst_66 : f32 to vector<1x64xf32>
    %166 = arith.select %51, %164, %165 : vector<1x64xi1>, vector<1x64xf32>
    %167 = arith.addf %162, %166 : vector<1x64xf32>
    %168 = vector.extract_strided_slice %141 {offsets = [6, 0], sizes = [1, 64], strides = [1, 1]} : vector<7x64xf32> to vector<1x64xf32>
    %c61_i32_67 = arith.constant 61 : i32
    %169 = tpu.dynamic_rotate %168 by %c61_i32_67 dim 1 : vector<1x64xf32>, i32 -> vector<1x64xf32>
    %cst_68 = arith.constant 0.000000e+00 : f32
    %170 = vector.broadcast %cst_68 : f32 to vector<1x64xf32>
    %171 = arith.select %60, %169, %170 : vector<1x64xi1>, vector<1x64xf32>
    %172 = arith.addf %167, %171 : vector<1x64xf32>
    %173 = vector.broadcast %4 : f32 to vector<1x64xf32>
    %174 = arith.addf %172, %173 : vector<1x64xf32>
    %175 = arith.negf %174 : vector<1x64xf32>
    %176 = math.exp %175 : vector<1x64xf32>
    %cst_69 = arith.constant 1.000000e+00 : f32
    %177 = vector.broadcast %cst_69 : f32 to vector<1x64xf32>
    %178 = arith.addf %177, %176 : vector<1x64xf32>
    %179 = arith.divf %177, %178 : vector<1x64xf32>
    %180 = vector.broadcast %140 : vector<32x1xf32> to vector<32x64xf32>
    %181 = vector.broadcast %179 : vector<1x64xf32> to vector<32x64xf32>
    %182 = arith.addf %180, %181 : vector<32x64xf32>
    %183 = arith.mulf %125, %182 : vector<32x64xf32>
    %c1_70 = arith.constant 1 : index
    %c0_71 = arith.constant 0 : index
    %c0_72 = arith.constant 0 : index
    %184 = vector.load %arg8[%c1_70, %c0_71, %c0_72] : memref<2x32x64xf32, #tpu.memory_space<vmem>>, vector<1x32x64xf32>
    %185 = vector.shape_cast %184 : vector<1x32x64xf32> to vector<32x64xf32>
    %186 = vector.shape_cast %183 : vector<32x64xf32> to vector<1x32x64xf32>
    tpu.vector_store %arg8[%c1_70, %c0_71, %c0_72], %186 {strides = array<i32>} : memref<2x32x64xf32, #tpu.memory_space<vmem>>, vector<1x32x64xf32>,
    return
  }
  func.func @transform_0(%arg0: i32) -> (i32, i32, i32) {
    %c0_i32 = arith.constant 0 : i32
    %c0_i32_0 = arith.constant 0 : i32
    %c0_i32_1 = arith.constant 0 : i32
    return %arg0, %c0_i32, %c0_i32_0 : i32, i32, i32
  }
  func.func @transform_1(%arg0: i32) -> (i32, i32) {
    %c0_i32 = arith.constant 0 : i32
    %c0_i32_0 = arith.constant 0 : i32
    %c0_i32_1 = arith.constant 0 : i32
    return %c0_i32, %c0_i32_0 : i32, i32
  }
  func.func @transform_2(%arg0: i32) -> (i32, i32) {
    %c0_i32 = arith.constant 0 : i32
    %c0_i32_0 = arith.constant 0 : i32
    %c0_i32_1 = arith.constant 0 : i32
    return %c0_i32, %c0_i32_0 : i32, i32
  }
  func.func @transform_3(%arg0: i32) -> (i32, i32) {
    %c0_i32 = arith.constant 0 : i32
    %c0_i32_0 = arith.constant 0 : i32
    %c0_i32_1 = arith.constant 0 : i32
    return %c0_i32, %c0_i32_0 : i32, i32
  }
  func.func @transform_4(%arg0: i32) -> (i32, i32) {
    %c0_i32 = arith.constant 0 : i32
    %c0_i32_0 = arith.constant 0 : i32
    %c0_i32_1 = arith.constant 0 : i32
    return %c0_i32, %c0_i32_0 : i32, i32
  }
  func.func @transform_5(%arg0: i32) -> (i32, i32) {
    %c0_i32 = arith.constant 0 : i32
    %c0_i32_0 = arith.constant 0 : i32
    %c0_i32_1 = arith.constant 0 : i32
    return %c0_i32, %c0_i32_0 : i32, i32
  }
  func.func @transform_6(%arg0: i32) -> i32 {
    %c0_i32 = arith.constant 0 : i32
    %c0_i32_0 = arith.constant 0 : i32
    return %c0_i32 : i32
  }
  func.func @transform_7(%arg0: i32) -> (i32, i32, i32) {
    %c0_i32 = arith.constant 0 : i32
    %c0_i32_0 = arith.constant 0 : i32
    %c0_i32_1 = arith.constant 0 : i32
    return %arg0, %c0_i32, %c0_i32_0 : i32, i32, i32
  }
}

</mosaic_0001>

<llo_original>
// kernel: tpu_custom_call.1
$region0: #{tpu_custom_call.1}
  #allocation0 [shape = 'u32[]', space=smem, size = 0x4, offset = 0x4, fixed_abs, tag = 'smem constant byte address 0x4 - core index']
  #allocation1 [shape = 'u32[144,128]{1,0:T(1,128)}', space=vmem, size = 0x12000, scoped, tag = 'internal scratch']
  #allocation2 [shape = 'f32[1]{0:T(128)S(6)}', space=smem, size = 0x200, scoped, tag = 'scoped memory for tpu_custom_call.1']
  %s0 = inlined_call_operand.vmem [shape: f32[2,32,64], index: 0, kind: input, shape index: {}]
  %s1 = inlined_call_operand.vmem [shape: f32[2,32], index: 1, kind: input, shape index: {}]
  %s2 = inlined_call_operand.vmem [shape: f32[2,1], index: 2, kind: input, shape index: {}]
  %s3 = inlined_call_operand.vmem [shape: f32[32,2], index: 3, kind: input, shape index: {}]
  %s4 = inlined_call_operand.vmem [shape: f32[32,1], index: 4, kind: input, shape index: {}]
  %s5 = inlined_call_operand.vmem [shape: f32[7,32], index: 5, kind: input, shape index: {}]
  %s6 = inlined_call_operand.<no memory space> [shape: f32[1], index: 6, kind: input, shape index: {}]
  %s7 = inlined_call_operand.hbm [shape: f32[2,32,64], index: 7, kind: output, shape index: {}]
  %s8 = sld [smem:[#allocation0]]
  $region38: #{tpu_custom_call.1} parent=0
    _
  %s10 = ssub.s32 1, %s8
  %s11 = scalar_select 0, %s10, %s8
  %12 = sst [smem:[#allocation2]] %s6
  $region1: #{tpu_custom_call.1} parent=0
    #allocation3 [shape = 'u8[32768]{0}', space=vmem, size = 0x8000, scoped, tag = 'output window, operand 0, single buffered']
    #allocation4 [shape = 's32[1]{0}', space=sflag, size = 0x4, scoped, tag = 'scoped memory for tpu_custom_call.1']
    %13 = vsyncpa [#allocation4], 0
    // Predicated region
    $region2: #{tpu_custom_call.1} parent=1 // pred_check
      _
    $region3: #{tpu_custom_call.1} parent=1 // pred_check_branch
      %15 = sbr.rel (0) target = $region5
    $region4: #{tpu_custom_call.1} parent=1 // pred_region
      _
    $region5: #{tpu_custom_call.1} parent=1 // pred_fallthru
      _
    // Predicated region
    $region6: #{tpu_custom_call.1} parent=1 // pred_check
      _
    $region7: #{tpu_custom_call.1} parent=1 // pred_check_branch
      %17 = sbr.rel (0) target = $region9
    $region8: #{tpu_custom_call.1} parent=1 // pred_region
      _
    $region9: #{tpu_custom_call.1} parent=1 // pred_fallthru
      _
    // Predicated region
    $region10: #{tpu_custom_call.1} parent=1 // pred_check
      _
    $region11: #{tpu_custom_call.1} parent=1 // pred_check_branch
      %19 = sbr.rel (0) target = $region13
    $region12: #{tpu_custom_call.1} parent=1 // pred_region
      _
    $region13: #{tpu_custom_call.1} parent=1 // pred_fallthru
      _
    // Predicated region
    $region14: #{tpu_custom_call.1} parent=1 // pred_check
      _
    $region15: #{tpu_custom_call.1} parent=1 // pred_check_branch
      %21 = sbr.rel (0) target = $region17
    $region16: #{tpu_custom_call.1} parent=1 // pred_region
      _
    $region17: #{tpu_custom_call.1} parent=1 // pred_fallthru
      _
    // Predicated region
    $region18: #{tpu_custom_call.1} parent=1 // pred_check
      _
    $region19: #{tpu_custom_call.1} parent=1 // pred_check_branch
      %23 = sbr.rel (0) target = $region21
    $region20: #{tpu_custom_call.1} parent=1 // pred_region
      _
    $region21: #{tpu_custom_call.1} parent=1 // pred_fallthru
      _
    // Predicated region
    $region22: #{tpu_custom_call.1} parent=1 // pred_check
      _
    $region23: #{tpu_custom_call.1} parent=1 // pred_check_branch
      %25 = sbr.rel (0) target = $region25
    $region24: #{tpu_custom_call.1} parent=1 // pred_region
      _
    $region25: #{tpu_custom_call.1} parent=1 // pred_fallthru
      _
    // Predicated region
    $region26: #{tpu_custom_call.1} parent=1 // pred_check
      _
    $region27: #{tpu_custom_call.1} parent=1 // pred_check_branch
      %27 = sbr.rel (0) target = $region29
    $region28: #{tpu_custom_call.1} parent=1 // pred_region
      _
    $region29: #{tpu_custom_call.1} parent=1 // pred_fallthru
      _
    %v28 = vld [vmem:[%s1] sm:$0x3]
    %v29 = vld [vmem:[%s2] sm:$0x3]
    %v30 = vld [vmem:[%s3] sm:$0xff]
    %v31 = vld [vmem:[%s3 + $0x8] sm:$0xff]
    %v32 = vld [vmem:[%s3 + $0x10] sm:$0xff]
    %v33 = vld [vmem:[%s3 + $0x18] sm:$0xff]
    %v34 = vld [vmem:[%s4] sm:$0xff]
    %v35 = vld [vmem:[%s4 + $0x8] sm:$0xff]
    %v36 = vld [vmem:[%s4 + $0x10] sm:$0xff]
    %v37 = vld [vmem:[%s4 + $0x18] sm:$0xff]
    %s38 = sld [smem:[#allocation2]]
    %v39 = vld [vmem:[%s5] sm:$0x7f]
    %v40 = vlaneseq
    %v41 = vand.u32 %v40, 127
    %v42 = vadd.s32 %v41, 4294967293
    %vm43 = vcmp.ge.s32.totalorder %v42, 0
    %vm44 = vcmp.lt.s32.totalorder %v42, 64
    %vm45 = vmand %vm43, %vm44
    %v46 = vadd.s32 %v41, 4294967294
    %vm47 = vcmp.ge.s32.totalorder %v46, 0
    %vm48 = vcmp.lt.s32.totalorder %v46, 64
    %vm49 = vmand %vm47, %vm48
    %v50 = vadd.s32 %v41, 4294967295
    %vm51 = vcmp.ge.s32.totalorder %v50, 0
    %vm52 = vcmp.lt.s32.totalorder %v50, 64
    %vm53 = vmand %vm51, %vm52
    %v54 = vadd.s32 %v41, 1
    %vm55 = vcmp.ge.s32.totalorder %v54, 0
    %vm56 = vcmp.lt.s32.totalorder %v54, 64
    %vm57 = vmand %vm55, %vm56
    %v58 = vadd.s32 %v41, 2
    %vm59 = vcmp.ge.s32.totalorder %v58, 0
    %vm60 = vcmp.lt.s32.totalorder %v58, 64
    %vm61 = vmand %vm59, %vm60
    %v62 = vadd.s32 %v41, 3
    %vm63 = vcmp.ge.s32.totalorder %v62, 0
    %vm64 = vcmp.lt.s32.totalorder %v62, 64
    %vm65 = vmand %vm63, %vm64
    %v66 = vld [vmem:[%s0] sm:$0xff]
    %v67 = vld [vmem:[%s0 + $0x8] sm:$0xff]
    %v68 = vld [vmem:[%s0 + $0x10] sm:$0xff]
    %v69 = vld [vmem:[%s0 + $0x18] sm:$0xff]
    %vm70 = vcmask 523264
    %v71 = vsel %vm70, %v66, 0.0
    %72 = vadd.xlane.f32.xlu0 %v71
    %v73 = vpop.xlane.xlu0 %72
    %v74 = vsel %vm70, %v67, 0.0
    %75 = vadd.xlane.f32.xlu0 %v74
    %v76 = vpop.xlane.xlu0 %75
    %v77 = vsel %vm70, %v68, 0.0
    %78 = vadd.xlane.f32.xlu0 %v77
    %v79 = vpop.xlane.xlu0 %78
    %v80 = vsel %vm70, %v69, 0.0
    %81 = vadd.xlane.f32.xlu0 %v80
    %v82 = vpop.xlane.xlu0 %81
    %v83 = vmul.f32 %v73, 0.015625
    %v84 = vmul.f32 %v76, 0.015625
    %v85 = vmul.f32 %v79, 0.015625
    %v86 = vmul.f32 %v82, 0.015625
    %vm87 = vcmask 261120
    %v89 = vsel %vm87, %v28, 0
    %91 = vmatprep.subr.mxu0 0.0
    %92 = vmatpush1.msra.mxu0 %v83
    %93 = vmatprep.subr.mxu0 0.0
    %94 = vmatpush1.msra.mxu0 %v84
    %95 = vmatprep.subr.mxu0 0.0
    %96 = vmatpush1.msra.mxu0 %v85
    %97 = vmatprep.subr.mxu0 0.0
    %98 = vmatpush1.msra.mxu0 %v86
    %99 = vmatprep.subr.mxu0 0.0
    %100 = vmatpush1.msra.mxu0 0.0
    %101 = vmatprep.subr.mxu0 0.0
    %102 = vmatpush1.msra.mxu0 0.0
    %103 = vmatprep.subr.mxu0 0.0
    %104 = vmatpush1.msra.mxu0 0.0
    %105 = vmatprep.subr.mxu0 0.0
    %106 = vmatpush1.msra.mxu0 0.0
    %107 = vmatprep.subr.mxu0 0.0
    %108 = vmatpush1.msra.mxu0 0.0
    %109 = vmatprep.subr.mxu0 0.0
    %110 = vmatpush1.msra.mxu0 0.0
    %111 = vmatprep.subr.mxu0 0.0
    %112 = vmatpush1.msra.mxu0 0.0
    %113 = vmatprep.subr.mxu0 0.0
    %114 = vmatpush1.msra.mxu0 0.0
    %115 = vmatprep.subr.mxu0 0.0
    %116 = vmatpush1.msra.mxu0 0.0
    %117 = vmatprep.subr.mxu0 0.0
    %118 = vmatpush1.msra.mxu0 0.0
    %119 = vmatprep.subr.mxu0 0.0
    %120 = vmatpush1.msra.mxu0 0.0
    %121 = vmatprep.subr.mxu0 0.0
    %122 = vmatpush1.msra.mxu0 0.0
    %123 = vmatprep.subr.mxu0 0.0
    %124 = vmatpush1.msra.mxu0 0.0
    %125 = vmatprep.subr.mxu0 0.0
    %126 = vmatpush1.msra.mxu0 0.0
    %127 = vmatprep.subr.mxu0 0.0
    %128 = vmatpush1.msra.mxu0 0.0
    %129 = vmatprep.subr.mxu0 0.0
    %130 = vmatpush1.msra.mxu0 0.0
    %131 = vmatprep.subr.mxu0 0.0
    %132 = vmatpush1.msra.mxu0 0.0
    %133 = vmatprep.subr.mxu0 0.0
    %134 = vmatpush1.msra.mxu0 0.0
    %135 = vmatprep.subr.mxu0 0.0
    %136 = vmatpush1.msra.mxu0 0.0
    %137 = vmatprep.subr.mxu0 0.0
    %138 = vmatpush1.msra.mxu0 0.0
    %139 = vmatprep.subr.mxu0 0.0
    %140 = vmatpush1.msra.mxu0 0.0
    %141 = vmatprep.subr.mxu0 0.0
    %142 = vmatpush1.msra.mxu0 0.0
    %143 = vmatprep.subr.mxu0 0.0
    %144 = vmatpush1.msra.mxu0 0.0
    %145 = vmatprep.subr.mxu0 0.0
    %146 = vmatpush1.msra.mxu0 0.0
    %147 = vmatprep.subr.mxu0 0.0
    %148 = vmatpush1.msra.mxu0 0.0
    %149 = vmatprep.subr.mxu0 0.0
    %150 = vmatpush1.msra.mxu0 0.0
    %151 = vmatprep.subr.mxu0 0.0
    %152 = vmatpush1.msra.mxu0 0.0
    %153 = vmatprep.subr.mxu0 0.0
    %154 = vmatpush1.msra.mxu0 0.0
    %155 = vmatprep.mubr.f32.mxu0 0.0
    %156 = vmatmul.mubr.f32.gmra.mrb[0].mxu0 %v89
    %v157 = vpop.f32.mrb[0].mxu0
    %v158 = vadd.f32 %v29, %v157
    %v159 = vpop.f32.mrb[0].mxu0
    %160 = vdwg.mxu0
    %v161 = vmax.f32 %v158, 0.0
    %vm162 = vcmask 15360
    %v164 = vsel %vm162, %v30, 0
    %v167 = vsel %vm162, %v31, 0
    %v170 = vsel %vm162, %v32, 0
    %v173 = vsel %vm162, %v33, 0
    %vm175 = vcmask 1041408
    %v177 = vsel %vm175, %v161, 0
    %179 = vmatprep.subr.mxu0 0.0
    %180 = vmatpush1.msra.mxu0 %v177
    %181 = vmatprep.subr.mxu0 0.0
    %182 = vmatpush1.msra.mxu0 0.0
    %183 = vmatprep.subr.mxu0 0.0
    %184 = vmatpush1.msra.mxu0 0.0
    %185 = vmatprep.subr.mxu0 0.0
    %186 = vmatpush1.msra.mxu0 0.0
    %187 = vmatprep.subr.mxu0 0.0
    %188 = vmatpush1.msra.mxu0 0.0
    %189 = vmatprep.subr.mxu0 0.0
    %190 = vmatpush1.msra.mxu0 0.0
    %191 = vmatprep.subr.mxu0 0.0
    %192 = vmatpush1.msra.mxu0 0.0
    %193 = vmatprep.subr.mxu0 0.0
    %194 = vmatpush1.msra.mxu0 0.0
    %195 = vmatprep.subr.mxu0 0.0
    %196 = vmatpush1.msra.mxu0 0.0
    %197 = vmatprep.subr.mxu0 0.0
    %198 = vmatpush1.msra.mxu0 0.0
    %199 = vmatprep.subr.mxu0 0.0
    %200 = vmatpush1.msra.mxu0 0.0
    %201 = vmatprep.subr.mxu0 0.0
    %202 = vmatpush1.msra.mxu0 0.0
    %203 = vmatprep.subr.mxu0 0.0
    %204 = vmatpush1.msra.mxu0 0.0
    %205 = vmatprep.subr.mxu0 0.0
    %206 = vmatpush1.msra.mxu0 0.0
    %207 = vmatprep.subr.mxu0 0.0
    %208 = vmatpush1.msra.mxu0 0.0
    %209 = vmatprep.subr.mxu0 0.0
    %210 = vmatpush1.msra.mxu0 0.0
    %211 = vmatprep.subr.mxu0 0.0
    %212 = vmatpush1.msra.mxu0 0.0
    %213 = vmatprep.subr.mxu0 0.0
    %214 = vmatpush1.msra.mxu0 0.0
    %215 = vmatprep.subr.mxu0 0.0
    %216 = vmatpush1.msra.mxu0 0.0
    %217 = vmatprep.subr.mxu0 0.0
    %218 = vmatpush1.msra.mxu0 0.0
    %219 = vmatprep.subr.mxu0 0.0
    %220 = vmatpush1.msra.mxu0 0.0
    %221 = vmatprep.subr.mxu0 0.0
    %222 = vmatpush1.msra.mxu0 0.0
    %223 = vmatprep.subr.mxu0 0.0
    %224 = vmatpush1.msra.mxu0 0.0
    %225 = vmatprep.subr.mxu0 0.0
    %226 = vmatpush1.msra.mxu0 0.0
    %227 = vmatprep.subr.mxu0 0.0
    %228 = vmatpush1.msra.mxu0 0.0
    %229 = vmatprep.subr.mxu0 0.0
    %230 = vmatpush1.msra.mxu0 0.0
    %231 = vmatprep.subr.mxu0 0.0
    %232 = vmatpush1.msra.mxu0 0.0
    %233 = vmatprep.subr.mxu0 0.0
    %234 = vmatpush1.msra.mxu0 0.0
    %235 = vmatprep.subr.mxu0 0.0
    %236 = vmatpush1.msra.mxu0 0.0
    %237 = vmatprep.subr.mxu0 0.0
    %238 = vmatpush1.msra.mxu0 0.0
    %239 = vmatprep.subr.mxu0 0.0
    %240 = vmatpush1.msra.mxu0 0.0
    %241 = vmatprep.subr.mxu0 0.0
    %242 = vmatpush1.msra.mxu0 0.0
    %243 = vmatprep.mubr.f32.mxu0 0.0
    %244 = vmatmul.mubr.f32.gmra.mrb[0].mxu0 %v164
    %v245 = vpop.f32.mrb[0].mxu0
    %v246 = vadd.f32 %v34, %v245
    %v247 = vpop.f32.mrb[0].mxu0
    %248 = vmatprep.mubr.f32.mxu0 0.0
    %249 = vmatmul.mubr.f32.gmra.mrb[0].mxu0 %v167
    %v250 = vpop.f32.mrb[0].mxu0
    %v251 = vadd.f32 %v35, %v250
    %v252 = vpop.f32.mrb[0].mxu0
    %253 = vmatprep.mubr.f32.mxu0 0.0
    %254 = vmatmul.mubr.f32.gmra.mrb[0].mxu0 %v170
    %v255 = vpop.f32.mrb[0].mxu0
    %v256 = vadd.f32 %v36, %v255
    %v257 = vpop.f32.mrb[0].mxu0
    %258 = vmatprep.mubr.f32.mxu0 0.0
    %259 = vmatmul.mubr.f32.gmra.mrb[0].mxu0 %v173
    %v260 = vpop.f32.mrb[0].mxu0
    %v261 = vadd.f32 %v37, %v260
    %v262 = vpop.f32.mrb[0].mxu0
    %263 = vdwg.mxu0
    %v264 = vxor.u32 %v246, 2147483648
    %v265 = vxor.u32 %v251, 2147483648
    %v266 = vxor.u32 %v256, 2147483648
    %v267 = vxor.u32 %v261, 2147483648
    %v268 = vmul.f32 %v264, 1.442695
    %v269 = vpow.pop %v268
    %v270 = vmul.f32 %v265, 1.442695
    %v271 = vpow.pop %v270
    %v272 = vmul.f32 %v266, 1.442695
    %v273 = vpow.pop %v272
    %v274 = vmul.f32 %v267, 1.442695
    %v275 = vpow.pop %v274
    %v276 = vadd.f32 %v269, 1.0
    %v277 = vadd.f32 %v271, 1.0
    %v278 = vadd.f32 %v273, 1.0
    %v279 = vadd.f32 %v275, 1.0
    %v280 = vrcp.pop %v276
    %v281 = vmul.f32 1.0, %v280
    %v282 = vrcp.pop %v277
    %v283 = vmul.f32 1.0, %v282
    %v284 = vrcp.pop %v278
    %v285 = vmul.f32 1.0, %v284
    %v286 = vrcp.pop %v279
    %v287 = vmul.f32 1.0, %v286
    %v289 = vsel %vm87, %v39, 0
    %291 = vmatprep.subr.mxu0 0.0
    %292 = vmatpush1.msra.mxu0 %v66
    %293 = vmatprep.subr.mxu0 0.0
    %294 = vmatpush1.msra.mxu0 %v67
    %295 = vmatprep.subr.mxu0 0.0
    %296 = vmatpush1.msra.mxu0 %v68
    %297 = vmatprep.subr.mxu0 0.0
    %298 = vmatpush1.msra.mxu0 %v69
    %299 = vmatprep.subr.mxu0 0.0
    %300 = vmatpush1.msra.mxu0 0.0
    %301 = vmatprep.subr.mxu0 0.0
    %302 = vmatpush1.msra.mxu0 0.0
    %303 = vmatprep.subr.mxu0 0.0
    %304 = vmatpush1.msra.mxu0 0.0
    %305 = vmatprep.subr.mxu0 0.0
    %306 = vmatpush1.msra.mxu0 0.0
    %307 = vmatprep.subr.mxu0 0.0
    %308 = vmatpush1.msra.mxu0 0.0
    %309 = vmatprep.subr.mxu0 0.0
    %310 = vmatpush1.msra.mxu0 0.0
    %311 = vmatprep.subr.mxu0 0.0
    %312 = vmatpush1.msra.mxu0 0.0
    %313 = vmatprep.subr.mxu0 0.0
    %314 = vmatpush1.msra.mxu0 0.0
    %315 = vmatprep.subr.mxu0 0.0
    %316 = vmatpush1.msra.mxu0 0.0
    %317 = vmatprep.subr.mxu0 0.0
    %318 = vmatpush1.msra.mxu0 0.0
    %319 = vmatprep.subr.mxu0 0.0
    %320 = vmatpush1.msra.mxu0 0.0
    %321 = vmatprep.subr.mxu0 0.0
    %322 = vmatpush1.msra.mxu0 0.0
    %323 = vmatprep.subr.mxu0 0.0
    %324 = vmatpush1.msra.mxu0 0.0
    %325 = vmatprep.subr.mxu0 0.0
    %326 = vmatpush1.msra.mxu0 0.0
    %327 = vmatprep.subr.mxu0 0.0
    %328 = vmatpush1.msra.mxu0 0.0
    %329 = vmatprep.subr.mxu0 0.0
    %330 = vmatpush1.msra.mxu0 0.0
    %331 = vmatprep.subr.mxu0 0.0
    %332 = vmatpush1.msra.mxu0 0.0
    %333 = vmatprep.subr.mxu0 0.0
    %334 = vmatpush1.msra.mxu0 0.0
    %335 = vmatprep.subr.mxu0 0.0
    %336 = vmatpush1.msra.mxu0 0.0
    %337 = vmatprep.subr.mxu0 0.0
    %338 = vmatpush1.msra.mxu0 0.0
    %339 = vmatprep.subr.mxu0 0.0
    %340 = vmatpush1.msra.mxu0 0.0
    %341 = vmatprep.subr.mxu0 0.0
    %342 = vmatpush1.msra.mxu0 0.0
    %343 = vmatprep.subr.mxu0 0.0
    %344 = vmatpush1.msra.mxu0 0.0
    %345 = vmatprep.subr.mxu0 0.0
    %346 = vmatpush1.msra.mxu0 0.0
    %347 = vmatprep.subr.mxu0 0.0
    %348 = vmatpush1.msra.mxu0 0.0
    %349 = vmatprep.subr.mxu0 0.0
    %350 = vmatpush1.msra.mxu0 0.0
    %351 = vmatprep.subr.mxu0 0.0
    %352 = vmatpush1.msra.mxu0 0.0
    %353 = vmatprep.subr.mxu0 0.0
    %354 = vmatpush1.msra.mxu0 0.0
    %355 = vmatprep.mubr.f32.mxu0 0.0
    %356 = vmatmul.mubr.f32.gmra.mrb[0].mxu0 %v289
    %v357 = vpop.f32.mrb[0].mxu0
    %v358 = vadd.f32 0.0, %v357
    %v359 = vpop.f32.mrb[0].mxu0
    %360 = vdwg.mxu0
    %vm361 = vcmask 1048064
    %362 = vrot.lane.b32.xlu0 %v358, 64
    %v363 = vpop.permute.xlu0 %362
    %v364 = vsel %vm361, %v363, %v358
    %365 = vrot.lane.b32.xlu0 %v364, 64
    %v366 = vpop.permute.xlu0 %365
    %v367 = vsel %vm361, %v366, %v358
    %369 = vrot.lane.b32.xlu0 %v367, 67
    %v370 = vpop.permute.xlu0 %369
    %v372 = vsel %vm45, %v370, 0.0
    %v374 = vrot.slane %v372, 5
    %v376 = vadd.f32 %v358, %v374
    %v378 = vrot.slane %v358, 1
    %380 = vrot.lane.b32.xlu0 %v378, 64
    %v381 = vpop.permute.xlu0 %380
    %v382 = vsel %vm361, %v381, %v378
    %383 = vrot.lane.b32.xlu0 %v382, 64
    %v384 = vpop.permute.xlu0 %383
    %v385 = vsel %vm361, %v384, %v378
    %387 = vrot.lane.b32.xlu0 %v385, 66
    %v388 = vpop.permute.xlu0 %387
    %v390 = vsel %vm49, %v388, 0.0
    %v392 = vrot.slane %v390, 5
    %v394 = vadd.f32 %v376, %v392
    %v395 = vrot.slane %v358, 2
    %397 = vrot.lane.b32.xlu0 %v395, 64
    %v398 = vpop.permute.xlu0 %397
    %v399 = vsel %vm361, %v398, %v395
    %400 = vrot.lane.b32.xlu0 %v399, 64
    %v401 = vpop.permute.xlu0 %400
    %v402 = vsel %vm361, %v401, %v395
    %404 = vrot.lane.b32.xlu0 %v402, 65
    %v405 = vpop.permute.xlu0 %404
    %v407 = vsel %vm53, %v405, 0.0
    %v409 = vrot.slane %v407, 5
    %v411 = vadd.f32 %v394, %v409
    %v412 = vrot.slane %v358, 4
    %414 = vrot.lane.b32.xlu0 %v412, 64
    %v415 = vpop.permute.xlu0 %414
    %v416 = vsel %vm361, %v415, %v412
    %417 = vrot.lane.b32.xlu0 %v416, 64
    %v418 = vpop.permute.xlu0 %417
    %v419 = vsel %vm361, %v418, %v412
    %421 = vrot.lane.b32.xlu0 %v419, 127
    %v422 = vpop.permute.xlu0 %421
    %v424 = vsel %vm57, %v422, 0.0
    %v426 = vrot.slane %v424, 5
    %v428 = vadd.f32 %v411, %v426
    %v429 = vrot.slane %v358, 5
    %431 = vrot.lane.b32.xlu0 %v429, 64
    %v432 = vpop.permute.xlu0 %431
    %v433 = vsel %vm361, %v432, %v429
    %434 = vrot.lane.b32.xlu0 %v433, 64
    %v435 = vpop.permute.xlu0 %434
    %v436 = vsel %vm361, %v435, %v429
    %438 = vrot.lane.b32.xlu0 %v436, 126
    %v439 = vpop.permute.xlu0 %438
    %v441 = vsel %vm61, %v439, 0.0
    %v443 = vrot.slane %v441, 5
    %v445 = vadd.f32 %v428, %v443
    %v446 = vrot.slane %v358, 6
    %448 = vrot.lane.b32.xlu0 %v446, 64
    %v449 = vpop.permute.xlu0 %448
    %v450 = vsel %vm361, %v449, %v446
    %451 = vrot.lane.b32.xlu0 %v450, 64
    %v452 = vpop.permute.xlu0 %451
    %v453 = vsel %vm361, %v452, %v446
    %455 = vrot.lane.b32.xlu0 %v453, 125
    %v456 = vpop.permute.xlu0 %455
    %v458 = vsel %vm65, %v456, 0.0
    %v460 = vrot.slane %v458, 5
    %v462 = vadd.f32 %v445, %v460
    %v463 = vstv %s38
    %v464 = vadd.f32 %v462, %v463
    %v465 = vxor.u32 %v464, 2147483648
    %v466 = vmul.f32 %v465, 1.442695
    %v467 = vpow.pop %v466
    %v468 = vadd.f32 %v467, 1.0
    %v469 = vrcp.pop %v468
    %v470 = vmul.f32 1.0, %v469
    %472 = vset.pattern.permute.xlu0 0
    %473 = vperm.xlu0 %472, %v281
    %v474 = vpop.permute.xlu0 %473
    %477 = vset.pattern.permute.xlu0 0
    %478 = vperm.xlu0 %477, %v283
    %v479 = vpop.permute.xlu0 %478
    %482 = vset.pattern.permute.xlu0 0
    %483 = vperm.xlu0 %482, %v285
    %v484 = vpop.permute.xlu0 %483
    %487 = vset.pattern.permute.xlu0 0
    %488 = vperm.xlu0 %487, %v287
    %v489 = vpop.permute.xlu0 %488
    %v491 = vlaneseq
    %v492 = vshrl.u32 %v491, 7
    %v493 = vsub.s32 3, %v492
    %v494 = vrot.slane %v470, %v493
    %v495 = vadd.f32 %v474, %v494
    %v496 = vadd.f32 %v479, %v494
    %v497 = vadd.f32 %v484, %v494
    %v498 = vadd.f32 %v489, %v494
    %v499 = vmul.f32 %v66, %v495
    %v500 = vmul.f32 %v67, %v496
    %v501 = vmul.f32 %v68, %v497
    %v502 = vmul.f32 %v69, %v498
    %503 = vst.msk [vmem:[#allocation3] sm:$0xff] %vm70, %v499
    %504 = vst.msk [vmem:[#allocation3 + $0x8] sm:$0xff] %vm70, %v500
    %505 = vst.msk [vmem:[#allocation3 + $0x10] sm:$0xff] %vm70, %v501
    %506 = vst.msk [vmem:[#allocation3 + $0x18] sm:$0xff] %vm70, %v502
    %s507 = scalar_lea.vmem %s0, 32
    %v508 = vld [vmem:[%s507] sm:$0xff]
    %v509 = vld [vmem:[%s507 + $0x8] sm:$0xff]
    %v510 = vld [vmem:[%s507 + $0x10] sm:$0xff]
    %v511 = vld [vmem:[%s507 + $0x18] sm:$0xff]
    %v512 = vsel %vm70, %v508, 0.0
    %513 = vadd.xlane.f32.xlu0 %v512
    %v514 = vpop.xlane.xlu0 %513
    %v515 = vsel %vm70, %v509, 0.0
    %516 = vadd.xlane.f32.xlu0 %v515
    %v517 = vpop.xlane.xlu0 %516
    %v518 = vsel %vm70, %v510, 0.0
    %519 = vadd.xlane.f32.xlu0 %v518
    %v520 = vpop.xlane.xlu0 %519
    %v521 = vsel %vm70, %v511, 0.0
    %522 = vadd.xlane.f32.xlu0 %v521
    %v523 = vpop.xlane.xlu0 %522
    %v524 = vmul.f32 %v514, 0.015625
    %v525 = vmul.f32 %v517, 0.015625
    %v526 = vmul.f32 %v520, 0.015625
    %v527 = vmul.f32 %v523, 0.015625
    %528 = vmatprep.subr.mxu0 0.0
    %529 = vmatpush1.msra.mxu0 %v524
    %530 = vmatprep.subr.mxu0 0.0
    %531 = vmatpush1.msra.mxu0 %v525
    %532 = vmatprep.subr.mxu0 0.0
    %533 = vmatpush1.msra.mxu0 %v526
    %534 = vmatprep.subr.mxu0 0.0
    %535 = vmatpush1.msra.mxu0 %v527
    %536 = vmatprep.subr.mxu0 0.0
    %537 = vmatpush1.msra.mxu0 0.0
    %538 = vmatprep.subr.mxu0 0.0
    %539 = vmatpush1.msra.mxu0 0.0
    %540 = vmatprep.subr.mxu0 0.0
    %541 = vmatpush1.msra.mxu0 0.0
    %542 = vmatprep.subr.mxu0 0.0
    %543 = vmatpush1.msra.mxu0 0.0
    %544 = vmatprep.subr.mxu0 0.0
    %545 = vmatpush1.msra.mxu0 0.0
    %546 = vmatprep.subr.mxu0 0.0
    %547 = vmatpush1.msra.mxu0 0.0
    %548 = vmatprep.subr.mxu0 0.0
    %549 = vmatpush1.msra.mxu0 0.0
    %550 = vmatprep.subr.mxu0 0.0
    %551 = vmatpush1.msra.mxu0 0.0
    %552 = vmatprep.subr.mxu0 0.0
    %553 = vmatpush1.msra.mxu0 0.0
    %554 = vmatprep.subr.mxu0 0.0
    %555 = vmatpush1.msra.mxu0 0.0
    %556 = vmatprep.subr.mxu0 0.0
    %557 = vmatpush1.msra.mxu0 0.0
    %558 = vmatprep.subr.mxu0 0.0
    %559 = vmatpush1.msra.mxu0 0.0
    %560 = vmatprep.subr.mxu0 0.0
    %561 = vmatpush1.msra.mxu0 0.0
    %562 = vmatprep.subr.mxu0 0.0
    %563 = vmatpush1.msra.mxu0 0.0
    %564 = vmatprep.subr.mxu0 0.0
    %565 = vmatpush1.msra.mxu0 0.0
    %566 = vmatprep.subr.mxu0 0.0
    %567 = vmatpush1.msra.mxu0 0.0
    %568 = vmatprep.subr.mxu0 0.0
    %569 = vmatpush1.msra.mxu0 0.0
    %570 = vmatprep.subr.mxu0 0.0
    %571 = vmatpush1.msra.mxu0 0.0
    %572 = vmatprep.subr.mxu0 0.0
    %573 = vmatpush1.msra.mxu0 0.0
    %574 = vmatprep.subr.mxu0 0.0
    %575 = vmatpush1.msra.mxu0 0.0
    %576 = vmatprep.subr.mxu0 0.0
    %577 = vmatpush1.msra.mxu0 0.0
    %578 = vmatprep.subr.mxu0 0.0
    %579 = vmatpush1.msra.mxu0 0.0
    %580 = vmatprep.subr.mxu0 0.0
    %581 = vmatpush1.msra.mxu0 0.0
    %582 = vmatprep.subr.mxu0 0.0
    %583 = vmatpush1.msra.mxu0 0.0
    %584 = vmatprep.subr.mxu0 0.0
    %585 = vmatpush1.msra.mxu0 0.0
    %586 = vmatprep.subr.mxu0 0.0
    %587 = vmatpush1.msra.mxu0 0.0
    %588 = vmatprep.subr.mxu0 0.0
    %589 = vmatpush1.msra.mxu0 0.0
    %590 = vmatprep.subr.mxu0 0.0
    %591 = vmatpush1.msra.mxu0 0.0
    %592 = vmatprep.mubr.f32.mxu0 0.0
    %593 = vmatmul.mubr.f32.gmra.mrb[0].mxu0 %v89
    %v594 = vpop.f32.mrb[0].mxu0
    %v595 = vadd.f32 %v29, %v594
    %v596 = vpop.f32.mrb[0].mxu0
    %597 = vdwg.mxu0
    %v598 = vmax.f32 %v595, 0.0
    %v600 = vsel %vm175, %v598, 0
    %602 = vmatprep.subr.mxu0 0.0
    %603 = vmatpush1.msra.mxu0 %v600
    %604 = vmatprep.subr.mxu0 0.0
    %605 = vmatpush1.msra.mxu0 0.0
    %606 = vmatprep.subr.mxu0 0.0
    %607 = vmatpush1.msra.mxu0 0.0
    %608 = vmatprep.subr.mxu0 0.0
    %609 = vmatpush1.msra.mxu0 0.0
    %610 = vmatprep.subr.mxu0 0.0
    %611 = vmatpush1.msra.mxu0 0.0
    %612 = vmatprep.subr.mxu0 0.0
    %613 = vmatpush1.msra.mxu0 0.0
    %614 = vmatprep.subr.mxu0 0.0
    %615 = vmatpush1.msra.mxu0 0.0
    %616 = vmatprep.subr.mxu0 0.0
    %617 = vmatpush1.msra.mxu0 0.0
    %618 = vmatprep.subr.mxu0 0.0
    %619 = vmatpush1.msra.mxu0 0.0
    %620 = vmatprep.subr.mxu0 0.0
    %621 = vmatpush1.msra.mxu0 0.0
    %622 = vmatprep.subr.mxu0 0.0
    %623 = vmatpush1.msra.mxu0 0.0
    %624 = vmatprep.subr.mxu0 0.0
    %625 = vmatpush1.msra.mxu0 0.0
    %626 = vmatprep.subr.mxu0 0.0
    %627 = vmatpush1.msra.mxu0 0.0
    %628 = vmatprep.subr.mxu0 0.0
    %629 = vmatpush1.msra.mxu0 0.0
    %630 = vmatprep.subr.mxu0 0.0
    %631 = vmatpush1.msra.mxu0 0.0
    %632 = vmatprep.subr.mxu0 0.0
    %633 = vmatpush1.msra.mxu0 0.0
    %634 = vmatprep.subr.mxu0 0.0
    %635 = vmatpush1.msra.mxu0 0.0
    %636 = vmatprep.subr.mxu0 0.0
    %637 = vmatpush1.msra.mxu0 0.0
    %638 = vmatprep.subr.mxu0 0.0
    %639 = vmatpush1.msra.mxu0 0.0
    %640 = vmatprep.subr.mxu0 0.0
    %641 = vmatpush1.msra.mxu0 0.0
    %642 = vmatprep.subr.mxu0 0.0
    %643 = vmatpush1.msra.mxu0 0.0
    %644 = vmatprep.subr.mxu0 0.0
    %645 = vmatpush1.msra.mxu0 0.0
    %646 = vmatprep.subr.mxu0 0.0
    %647 = vmatpush1.msra.mxu0 0.0
    %648 = vmatprep.subr.mxu0 0.0
    %649 = vmatpush1.msra.mxu0 0.0
    %650 = vmatprep.subr.mxu0 0.0
    %651 = vmatpush1.msra.mxu0 0.0
    %652 = vmatprep.subr.mxu0 0.0
    %653 = vmatpush1.msra.mxu0 0.0
    %654 = vmatprep.subr.mxu0 0.0
    %655 = vmatpush1.msra.mxu0 0.0
    %656 = vmatprep.subr.mxu0 0.0
    %657 = vmatpush1.msra.mxu0 0.0
    %658 = vmatprep.subr.mxu0 0.0
    %659 = vmatpush1.msra.mxu0 0.0
    %660 = vmatprep.subr.mxu0 0.0
    %661 = vmatpush1.msra.mxu0 0.0
    %662 = vmatprep.subr.mxu0 0.0
    %663 = vmatpush1.msra.mxu0 0.0
    %664 = vmatprep.subr.mxu0 0.0
    %665 = vmatpush1.msra.mxu0 0.0
    %666 = vmatprep.mubr.f32.mxu0 0.0
    %667 = vmatmul.mubr.f32.gmra.mrb[0].mxu0 %v164
    %v668 = vpop.f32.mrb[0].mxu0
    %v669 = vadd.f32 %v34, %v668
    %v670 = vpop.f32.mrb[0].mxu0
    %671 = vmatprep.mubr.f32.mxu0 0.0
    %672 = vmatmul.mubr.f32.gmra.mrb[0].mxu0 %v167
    %v673 = vpop.f32.mrb[0].mxu0
    %v674 = vadd.f32 %v35, %v673
    %v675 = vpop.f32.mrb[0].mxu0
    %676 = vmatprep.mubr.f32.mxu0 0.0
    %677 = vmatmul.mubr.f32.gmra.mrb[0].mxu0 %v170
    %v678 = vpop.f32.mrb[0].mxu0
    %v679 = vadd.f32 %v36, %v678
    %v680 = vpop.f32.mrb[0].mxu0
    %681 = vmatprep.mubr.f32.mxu0 0.0
    %682 = vmatmul.mubr.f32.gmra.mrb[0].mxu0 %v173
    %v683 = vpop.f32.mrb[0].mxu0
    %v684 = vadd.f32 %v37, %v683
    %v685 = vpop.f32.mrb[0].mxu0
    %686 = vdwg.mxu0
    %v687 = vxor.u32 %v669, 2147483648
    %v688 = vxor.u32 %v674, 2147483648
    %v689 = vxor.u32 %v679, 2147483648
    %v690 = vxor.u32 %v684, 2147483648
    %v691 = vmul.f32 %v687, 1.442695
    %v692 = vpow.pop %v691
    %v693 = vmul.f32 %v688, 1.442695
    %v694 = vpow.pop %v693
    %v695 = vmul.f32 %v689, 1.442695
    %v696 = vpow.pop %v695
    %v697 = vmul.f32 %v690, 1.442695
    %v698 = vpow.pop %v697
    %v699 = vadd.f32 %v692, 1.0
    %v700 = vadd.f32 %v694, 1.0
    %v701 = vadd.f32 %v696, 1.0
    %v702 = vadd.f32 %v698, 1.0
    %v703 = vrcp.pop %v699
    %v704 = vmul.f32 1.0, %v703
    %v705 = vrcp.pop %v700
    %v706 = vmul.f32 1.0, %v705
    %v707 = vrcp.pop %v701
    %v708 = vmul.f32 1.0, %v707
    %v709 = vrcp.pop %v702
    %v710 = vmul.f32 1.0, %v709
    %711 = vmatprep.subr.mxu0 0.0
    %712 = vmatpush1.msra.mxu0 %v508
    %713 = vmatprep.subr.mxu0 0.0
    %714 = vmatpush1.msra.mxu0 %v509
    %715 = vmatprep.subr.mxu0 0.0
    %716 = vmatpush1.msra.mxu0 %v510
    %717 = vmatprep.subr.mxu0 0.0
    %718 = vmatpush1.msra.mxu0 %v511
    %719 = vmatprep.subr.mxu0 0.0
    %720 = vmatpush1.msra.mxu0 0.0
    %721 = vmatprep.subr.mxu0 0.0
    %722 = vmatpush1.msra.mxu0 0.0
    %723 = vmatprep.subr.mxu0 0.0
    %724 = vmatpush1.msra.mxu0 0.0
    %725 = vmatprep.subr.mxu0 0.0
    %726 = vmatpush1.msra.mxu0 0.0
    %727 = vmatprep.subr.mxu0 0.0
    %728 = vmatpush1.msra.mxu0 0.0
    %729 = vmatprep.subr.mxu0 0.0
    %730 = vmatpush1.msra.mxu0 0.0
    %731 = vmatprep.subr.mxu0 0.0
    %732 = vmatpush1.msra.mxu0 0.0
    %733 = vmatprep.subr.mxu0 0.0
    %734 = vmatpush1.msra.mxu0 0.0
    %735 = vmatprep.subr.mxu0 0.0
    %736 = vmatpush1.msra.mxu0 0.0
    %737 = vmatprep.subr.mxu0 0.0
    %738 = vmatpush1.msra.mxu0 0.0
    %739 = vmatprep.subr.mxu0 0.0
    %740 = vmatpush1.msra.mxu0 0.0
    %741 = vmatprep.subr.mxu0 0.0
    %742 = vmatpush1.msra.mxu0 0.0
    %743 = vmatprep.subr.mxu0 0.0
    %744 = vmatpush1.msra.mxu0 0.0
    %745 = vmatprep.subr.mxu0 0.0
    %746 = vmatpush1.msra.mxu0 0.0
    %747 = vmatprep.subr.mxu0 0.0
    %748 = vmatpush1.msra.mxu0 0.0
    %749 = vmatprep.subr.mxu0 0.0
    %750 = vmatpush1.msra.mxu0 0.0
    %751 = vmatprep.subr.mxu0 0.0
    %752 = vmatpush1.msra.mxu0 0.0
    %753 = vmatprep.subr.mxu0 0.0
    %754 = vmatpush1.msra.mxu0 0.0
    %755 = vmatprep.subr.mxu0 0.0
    %756 = vmatpush1.msra.mxu0 0.0
    %757 = vmatprep.subr.mxu0 0.0
    %758 = vmatpush1.msra.mxu0 0.0
    %759 = vmatprep.subr.mxu0 0.0
    %760 = vmatpush1.msra.mxu0 0.0
    %761 = vmatprep.subr.mxu0 0.0
    %762 = vmatpush1.msra.mxu0 0.0
    %763 = vmatprep.subr.mxu0 0.0
    %764 = vmatpush1.msra.mxu0 0.0
    %765 = vmatprep.subr.mxu0 0.0
    %766 = vmatpush1.msra.mxu0 0.0
    %767 = vmatprep.subr.mxu0 0.0
    %768 = vmatpush1.msra.mxu0 0.0
    %769 = vmatprep.subr.mxu0 0.0
    %770 = vmatpush1.msra.mxu0 0.0
    %771 = vmatprep.subr.mxu0 0.0
    %772 = vmatpush1.msra.mxu0 0.0
    %773 = vmatprep.subr.mxu0 0.0
    %774 = vmatpush1.msra.mxu0 0.0
    %775 = vmatprep.mubr.f32.mxu0 0.0
    %776 = vmatmul.mubr.f32.gmra.mrb[0].mxu0 %v289
    %v777 = vpop.f32.mrb[0].mxu0
    %v778 = vadd.f32 0.0, %v777
    %v779 = vpop.f32.mrb[0].mxu0
    %780 = vdwg.mxu0
    %781 = vrot.lane.b32.xlu0 %v778, 64
    %v782 = vpop.permute.xlu0 %781
    %v783 = vsel %vm361, %v782, %v778
    %784 = vrot.lane.b32.xlu0 %v783, 64
    %v785 = vpop.permute.xlu0 %784
    %v786 = vsel %vm361, %v785, %v778
    %788 = vrot.lane.b32.xlu0 %v786, 67
    %v789 = vpop.permute.xlu0 %788
    %v791 = vsel %vm45, %v789, 0.0
    %v793 = vrot.slane %v791, 5
    %v795 = vadd.f32 %v778, %v793
    %v797 = vrot.slane %v778, 1
    %799 = vrot.lane.b32.xlu0 %v797, 64
    %v800 = vpop.permute.xlu0 %799
    %v801 = vsel %vm361, %v800, %v797
    %802 = vrot.lane.b32.xlu0 %v801, 64
    %v803 = vpop.permute.xlu0 %802
    %v804 = vsel %vm361, %v803, %v797
    %806 = vrot.lane.b32.xlu0 %v804, 66
    %v807 = vpop.permute.xlu0 %806
    %v809 = vsel %vm49, %v807, 0.0
    %v811 = vrot.slane %v809, 5
    %v813 = vadd.f32 %v795, %v811
    %v814 = vrot.slane %v778, 2
    %816 = vrot.lane.b32.xlu0 %v814, 64
    %v817 = vpop.permute.xlu0 %816
    %v818 = vsel %vm361, %v817, %v814
    %819 = vrot.lane.b32.xlu0 %v818, 64
    %v820 = vpop.permute.xlu0 %819
    %v821 = vsel %vm361, %v820, %v814
    %823 = vrot.lane.b32.xlu0 %v821, 65
    %v824 = vpop.permute.xlu0 %823
    %v826 = vsel %vm53, %v824, 0.0
    %v828 = vrot.slane %v826, 5
    %v830 = vadd.f32 %v813, %v828
    %v831 = vrot.slane %v778, 4
    %833 = vrot.lane.b32.xlu0 %v831, 64
    %v834 = vpop.permute.xlu0 %833
    %v835 = vsel %vm361, %v834, %v831
    %836 = vrot.lane.b32.xlu0 %v835, 64
    %v837 = vpop.permute.xlu0 %836
    %v838 = vsel %vm361, %v837, %v831
    %840 = vrot.lane.b32.xlu0 %v838, 127
    %v841 = vpop.permute.xlu0 %840
    %v843 = vsel %vm57, %v841, 0.0
    %v845 = vrot.slane %v843, 5
    %v847 = vadd.f32 %v830, %v845
    %v848 = vrot.slane %v778, 5
    %850 = vrot.lane.b32.xlu0 %v848, 64
    %v851 = vpop.permute.xlu0 %850
    %v852 = vsel %vm361, %v851, %v848
    %853 = vrot.lane.b32.xlu0 %v852, 64
    %v854 = vpop.permute.xlu0 %853
    %v855 = vsel %vm361, %v854, %v848
    %857 = vrot.lane.b32.xlu0 %v855, 126
    %v858 = vpop.permute.xlu0 %857
    %v860 = vsel %vm61, %v858, 0.0
    %v862 = vrot.slane %v860, 5
    %v864 = vadd.f32 %v847, %v862
    %v865 = vrot.slane %v778, 6
    %867 = vrot.lane.b32.xlu0 %v865, 64
    %v868 = vpop.permute.xlu0 %867
    %v869 = vsel %vm361, %v868, %v865
    %870 = vrot.lane.b32.xlu0 %v869, 64
    %v871 = vpop.permute.xlu0 %870
    %v872 = vsel %vm361, %v871, %v865
    %874 = vrot.lane.b32.xlu0 %v872, 125
    %v875 = vpop.permute.xlu0 %874
    %v877 = vsel %vm65, %v875, 0.0
    %v879 = vrot.slane %v877, 5
    %v881 = vadd.f32 %v864, %v879
    %v882 = vadd.f32 %v881, %v463
    %v883 = vxor.u32 %v882, 2147483648
    %v884 = vmul.f32 %v883, 1.442695
    %v885 = vpow.pop %v884
    %v886 = vadd.f32 %v885, 1.0
    %v887 = vrcp.pop %v886
    %v888 = vmul.f32 1.0, %v887
    %890 = vset.pattern.permute.xlu0 0
    %891 = vperm.xlu0 %890, %v704
    %v892 = vpop.permute.xlu0 %891
    %895 = vset.pattern.permute.xlu0 0
    %896 = vperm.xlu0 %895, %v706
    %v897 = vpop.permute.xlu0 %896
    %900 = vset.pattern.permute.xlu0 0
    %901 = vperm.xlu0 %900, %v708
    %v902 = vpop.permute.xlu0 %901
    %905 = vset.pattern.permute.xlu0 0
    %906 = vperm.xlu0 %905, %v710
    %v907 = vpop.permute.xlu0 %906
    %v909 = vlaneseq
    %v910 = vshrl.u32 %v909, 7
    %v911 = vsub.s32 3, %v910
    %v912 = vrot.slane %v888, %v911
    %v913 = vadd.f32 %v892, %v912
    %v914 = vadd.f32 %v897, %v912
    %v915 = vadd.f32 %v902, %v912
    %v916 = vadd.f32 %v907, %v912
    %v917 = vmul.f32 %v508, %v913
    %v918 = vmul.f32 %v509, %v914
    %v919 = vmul.f32 %v510, %v915
    %v920 = vmul.f32 %v511, %v916
    %s921 = scalar_lea.vmem [#allocation3], 32
    %922 = vst.msk [vmem:[%s921] sm:$0xff] %vm70, %v917
    %923 = vst.msk [vmem:[%s921 + $0x8] sm:$0xff] %vm70, %v918
    %924 = vst.msk [vmem:[%s921 + $0x10] sm:$0xff] %vm70, %v919
    %925 = vst.msk [vmem:[%s921 + $0x18] sm:$0xff] %vm70, %v920
    // Predicated region
    $region30: #{tpu_custom_call.1} parent=1 // pred_check
      _
    $region31: #{tpu_custom_call.1} parent=1 // pred_check_branch
      %927 = sbr.rel (0) target = $region33
    $region32: #{tpu_custom_call.1} parent=1 // pred_region
      %s929 = ssub.s32 1024, 1024
      %930 = vsyncadd [#allocation4], %s929
      %s931 = sshll.u32 [#allocation3], 4
      %s932 = int_to_ptr.vmem [resolvable:$true] %s931
      %937 = dma.vmem_to_hbm [thread:$0]  %s932, 1024, %s7, [#allocation4], 128, 128, 8
    $region33: #{tpu_custom_call.1} parent=1 // pred_fallthru
      _
    // Predicated region
    $region34: #{tpu_custom_call.1} parent=1 // pred_check
      _
    $region35: #{tpu_custom_call.1} parent=1 // pred_check_branch
      %939 = sbr.rel (0) target = $region37
    $region36: #{tpu_custom_call.1} parent=1 // pred_region
      %940 = dma.done [#allocation4], 1024
    $region37: #{tpu_custom_call.1} parent=1 // pred_fallthru
      _
    %941 = vsyncpa [#allocation4], 1

</llo_original>
